<compile_context>
chip_gen: v5e
topology: v5e:2x2
jax: 0.10.0
libtpu: 0.0.40
codegen_flags: <defaults>
</compile_context>

<pallas_src>
import math

import jax
import jax.numpy as jnp
from jax.experimental import pallas as pl
from jax.experimental.pallas import tpu as pltpu

LANE = 128                 # TPU lane width (last dim)
SUB = 8                    # sublane count (second-to-last dim of one f32 vreg)
STREAM_TILE_M = 1024       # rows per streaming block (512 KiB f32 / input)
STREAM_TILE_M_2TC = 2048   # bigger blocks when two TensorCores share chip HBM
RESIDENT_TILE_M = 1024     # rows per block while filling the VMEM-resident copy
RESIDENT_RESERVE = 28 << 20  # VMEM headroom: double buffers + temporaries


# ------------------------------ hardware query ------------------------------ #

def _tpu_params():
    """(vmem_capacity_bytes, num_tensorcores) with conservative fallbacks."""
    vmem_cap = 64 << 20          # conservative default (v7x per-TC VMEM)
    num_cores = 1
    try:
        vmem_cap = int(pltpu.get_tpu_info().vmem_capacity_bytes)
    except Exception:
        pass
    try:
        kind = jax.devices()[0].device_kind.lower()
    except Exception:
        kind = ""
    if "v7" in kind:
        vmem_cap = min(vmem_cap, 64 << 20)     # 64 MiB per TensorCore on v7x
    if ("v7" in kind) or ("v4" in kind) or ("v5p" in kind):
        num_cores = 2                          # two TensorCores share chip HBM
    vmem_cap = max(32 << 20, min(vmem_cap, 128 << 20))
    return vmem_cap, num_cores


def _row_align(dtype):
    # Rows per native-dtype sublane tile: 8 (f32), 16 (bf16/f16), 32 (int8/fp8).
    itemsize = jnp.dtype(dtype).itemsize
    return SUB * max(1, 4 // itemsize)


def _round_up(x, m):
    return ((x + m - 1) // m) * m


# ------------------------------ small helpers ------------------------------- #

def _fold_sum(x, tile_m):   # (tile_m, LANE) -> (8, LANE) partial sums, VPU only
    return jnp.sum(x.reshape(tile_m // SUB, SUB, LANE), axis=0)


def _fold_max(x, tile_m):   # (tile_m, LANE) -> (8, LANE) partial max
    return jnp.max(x.reshape(tile_m // SUB, SUB, LANE), axis=0)


# ------------------------------ resident kernel ----------------------------- #
# One pallas_call: stream tiles (pipelined DMA), cache them in VMEM scratch,
# accumulate the |diff| max; on the last tile compute c and loop over the
# resident copy for the masked sums.  HBM is read exactly once.

def _make_resident_kernel(rows, tile_m, num_tiles):
    ragged = (rows % tile_m) != 0

    def kernel(p_ref, g_ref, l1_ref, l2_ref, n1_ref, nm_ref,
               p_scr, g_scr, max_scr):
        ti = pl.program_id(0)

        @pl.when(ti == 0)
        def _():
            max_scr[...] = jnp.zeros_like(max_scr)
            l1_ref[...] = jnp.zeros_like(l1_ref)
            l2_ref[...] = jnp.zeros_like(l2_ref)
            n1_ref[...] = jnp.zeros_like(n1_ref)
            nm_ref[...] = jnp.zeros_like(nm_ref)

        def store_and_max(p_nat, g_nat):
            # Keep native-dtype tiles resident so the sums pass never touches HBM.
            p_scr[ti] = p_nat
            g_scr[ti] = g_nat
            absd = jnp.abs(p_nat.astype(jnp.float32) - g_nat.astype(jnp.float32))
            max_scr[...] = jnp.maximum(max_scr[...], _fold_max(absd, tile_m))

        if ragged:
            last = ti == num_tiles - 1

            @pl.when(jnp.logical_not(last))
            def _():                                   # fast path: no masking
                store_and_max(p_ref[...], g_ref[...])

            @pl.when(last)
            def _():
                # Sanitize once: zero rows past the logical end so the sums
                # loop below needs no masking at all (gt==0 rows are ignored,
                # |0-0|=0 is neutral for the max).
                row = (num_tiles - 1) * tile_m + jax.lax.broadcasted_iota(
                    jnp.int32, (tile_m, LANE), 0)
                valid = row < rows
                pn = p_ref[...]
                gn = g_ref[...]
                store_and_max(jnp.where(valid, pn, jnp.zeros_like(pn)),
                              jnp.where(valid, gn, jnp.zeros_like(gn)))
        else:
            store_and_max(p_ref[...], g_ref[...])

        @pl.when(ti == num_tiles - 1)
        def _():
            c = 0.2 * jnp.max(max_scr[...])
            zeros = jnp.zeros((SUB, LANE), jnp.float32)

            def body(t, carry):
                l1a, l2a, n1a, nma = carry
                p = p_scr[t].astype(jnp.float32)
                g = g_scr[t].astype(jnp.float32)
                diff = p - g
                absd = jnp.abs(diff)
                mask = g > 0.0
                idx1 = (absd <= c) & mask
                idx2 = (absd > c) & mask
                return (l1a + _fold_sum(jnp.where(idx1, absd, 0.0), tile_m),
                        l2a + _fold_sum(jnp.where(idx2, diff * diff, 0.0), tile_m),
                        n1a + _fold_sum(idx1.astype(jnp.float32), tile_m),
                        nma + _fold_sum(mask.astype(jnp.float32), tile_m))

            l1a, l2a, n1a, nma = jax.lax.fori_loop(
                0, num_tiles, body, (zeros, zeros, zeros, zeros))
            l1_ref[...] = l1a
            l2_ref[...] = l2a
            n1_ref[...] = n1a
            nm_ref[...] = nma

    return kernel


def _berhu_resident(p2, g2, rows, row_align, vmem_cap, tile_m):
    if tile_m is None:
        tile_m = RESIDENT_TILE_M
    tile_m = max(row_align, min(tile_m, rows))
    tile_m = (tile_m // row_align) * row_align
    num_tiles = pl.cdiv(rows, tile_m)

    blk = pl.BlockSpec((tile_m, LANE), lambda i: (i, 0))
    acc_spec = pl.BlockSpec((SUB, LANE), lambda i: (0, 0))
    in_bytes = p2.size * p2.dtype.itemsize + g2.size * g2.dtype.itemsize

    outs = pl.pallas_call(
        _make_resident_kernel(rows, tile_m, num_tiles),
        out_shape=tuple(jax.ShapeDtypeStruct((SUB, LANE), jnp.float32)
                        for _ in range(4)),
        grid=(num_tiles,),
        in_specs=[blk, blk],
        out_specs=tuple(acc_spec for _ in range(4)),
        scratch_shapes=[
            pltpu.VMEM((num_tiles, tile_m, LANE), p2.dtype),   # resident pred
            pltpu.VMEM((num_tiles, tile_m, LANE), g2.dtype),   # resident gt
            pltpu.VMEM((SUB, LANE), jnp.float32),              # running max
        ],
        compiler_params=pltpu.CompilerParams(
            dimension_semantics=("arbitrary",),
            vmem_limit_bytes=vmem_cap - (4 << 20)),
        cost_estimate=pl.CostEstimate(
            flops=16 * p2.size, transcendentals=0,
            bytes_accessed=in_bytes + 4 * SUB * LANE * 4),
    )(p2, g2)
    return tuple(jnp.sum(o) for o in outs)


# ------------------------------ streaming kernels --------------------------- #
# Two passes for inputs too large for VMEM residency.  (8,128) vreg-shaped
# per-core accumulators; masking only on ragged/duplicated tiles.

def _make_absmax_kernel(rows, tile_m, tpc, aligned):
    def kernel(p_ref, g_ref, acc_ref):
        ti = pl.program_id(1)

        @pl.when(ti == 0)
        def _():
            acc_ref[...] = jnp.zeros_like(acc_ref)   # |d| >= 0, safe identity

        def accumulate(valid):
            absd = jnp.abs(p_ref[...].astype(jnp.float32)
                           - g_ref[...].astype(jnp.float32))
            if valid is not None:
                absd = jnp.where(valid, absd, 0.0)
            acc_ref[...] = jnp.maximum(acc_ref[...], _fold_max(absd, tile_m))

        if aligned:
            accumulate(None)                          # no tile ever needs masking
        else:
            logical_tile = pl.program_id(0) * tpc + ti
            needs_mask = (logical_tile + 1) * tile_m > rows

            @pl.when(jnp.logical_not(needs_mask))
            def _():                                   # fast unmasked path
                accumulate(None)

            @pl.when(needs_mask)
            def _():                                   # last / duplicated tile
                row = logical_tile * tile_m + jax.lax.broadcasted_iota(
                    jnp.int32, (tile_m, LANE), 0)
                accumulate(row < rows)
    return kernel


def _make_sums_kernel(rows, tile_m, tpc, aligned):
    def kernel(c_ref, p_ref, g_ref, l1_ref, l2_ref, n1_ref, nm_ref):
        ti = pl.program_id(1)

        @pl.when(ti == 0)
        def _():
            l1_ref[...] = jnp.zeros_like(l1_ref)
            l2_ref[...] = jnp.zeros_like(l2_ref)
            n1_ref[...] = jnp.zeros_like(n1_ref)
            nm_ref[...] = jnp.zeros_like(nm_ref)

        c = c_ref[0]                                   # scalar threshold (SMEM)

        def accumulate(valid):
            p = p_ref[...].astype(jnp.float32)
            g = g_ref[...].astype(jnp.float32)
            diff = p - g
            absd = jnp.abs(diff)
            mask = g > 0.0
            if valid is not None:
                mask = mask & valid
            idx1 = (absd <= c) & mask
            idx2 = (absd > c) & mask
            l1_ref[...] += _fold_sum(jnp.where(idx1, absd, 0.0), tile_m)
            l2_ref[...] += _fold_sum(jnp.where(idx2, diff * diff, 0.0), tile_m)
            n1_ref[...] += _fold_sum(idx1.astype(jnp.float32), tile_m)
            nm_ref[...] += _fold_sum(mask.astype(jnp.float32), tile_m)

        if aligned:
            accumulate(None)
        else:
            logical_tile = pl.program_id(0) * tpc + ti
            needs_mask = (logical_tile + 1) * tile_m > rows

            @pl.when(jnp.logical_not(needs_mask))
            def _():
                accumulate(None)

            @pl.when(needs_mask)
            def _():
                row = logical_tile * tile_m + jax.lax.broadcasted_iota(
                    jnp.int32, (tile_m, LANE), 0)
                accumulate(row < rows)
    return kernel


def _berhu_streaming(p2, g2, rows, row_align, vmem_cap, num_cores, tile_m):
    if tile_m is None:
        tile_m = STREAM_TILE_M_2TC if num_cores >= 2 else STREAM_TILE_M
    tile_m = max(row_align, min(tile_m, rows))
    tile_m = (tile_m // row_align) * row_align

    num_tiles = pl.cdiv(rows, tile_m)
    num_cores = max(1, min(num_cores, num_tiles))
    tpc = pl.cdiv(num_tiles, num_cores)               # tiles per core
    grid = (num_cores, tpc)
    has_dup = num_cores * tpc > num_tiles
    aligned = (rows % tile_m == 0) and not has_dup

    if has_dup:
        def in_idx(ci, ti):
            # Clamp so duplicated (fully masked) tiles never index out of bounds.
            return (jnp.minimum(ci * tpc + ti, num_tiles - 1), 0)
    else:
        def in_idx(ci, ti):
            return (ci * tpc + ti, 0)

    blk = pl.BlockSpec((tile_m, LANE), in_idx)
    acc_spec = pl.BlockSpec((None, SUB, LANE), lambda ci, ti: (ci, 0, 0))
    vmem_limit = max(32 << 20, min(vmem_cap - (16 << 20), 96 << 20))
    params = pltpu.CompilerParams(
        dimension_semantics=("parallel", "arbitrary"),
        vmem_limit_bytes=vmem_limit)

    in_bytes = p2.size * p2.dtype.itemsize + g2.size * g2.dtype.itemsize
    acc_bytes = num_cores * SUB * LANE * 4

    # Pass 1: per-core vreg-shaped running max of |pred - gt|.
    max_acc = pl.pallas_call(
        _make_absmax_kernel(rows, tile_m, tpc, aligned),
        out_shape=jax.ShapeDtypeStruct((num_cores, SUB, LANE), jnp.float32),
        grid=grid,
        in_specs=[blk, blk],
        out_specs=acc_spec,
        compiler_params=params,
        cost_estimate=pl.CostEstimate(
            flops=4 * p2.size, transcendentals=0,
            bytes_accessed=in_bytes + acc_bytes),
    )(p2, g2)
    c = (0.2 * jnp.max(max_acc)).reshape(1).astype(jnp.float32)

    # Pass 2: masked partial sums / counts (n2 derived in the wrapper).
    l1a, l2a, n1a, nma = pl.pallas_call(
        _make_sums_kernel(rows, tile_m, tpc, aligned),
        out_shape=tuple(jax.ShapeDtypeStruct((num_cores, SUB, LANE), jnp.float32)
                        for _ in range(4)),
        grid=grid,
        in_specs=[pl.BlockSpec(memory_space=pltpu.MemorySpace.SMEM), blk, blk],
        out_specs=tuple(acc_spec for _ in range(4)),
        compiler_params=params,
        cost_estimate=pl.CostEstimate(
            flops=12 * p2.size, transcendentals=0,
            bytes_accessed=in_bytes + 4 * acc_bytes + 4),
    )(c, p2, g2)
    return jnp.sum(l1a), jnp.sum(l2a), jnp.sum(n1a), jnp.sum(nma)


# --------------------------------- wrapper ----------------------------------- #

def _flatten_2d(pred, gt):
    p = pred.reshape(-1)
    g = gt.reshape(-1)
    total = p.shape[0]
    row_align = max(_row_align(p.dtype), _row_align(g.dtype))
    chunk = row_align * LANE
    padn = (-total) % chunk
    if padn:
        # Zero padding is neutral for berHu (|0-0|=0, gt==0 is masked out).
        p = jnp.pad(p, (0, padn))
        g = jnp.pad(g, (0, padn))
    rows = (total + padn) // LANE
    return p.reshape(rows, LANE), g.reshape(rows, LANE), rows, row_align


def berhu_loss(pred, gt, *, force_path=None, tile_m=None, force_cores=None):
    assert pred.shape == gt.shape
    total = math.prod(pred.shape)
    if total == 0:
        return jnp.float32(0.0)   # degenerate input: define loss as 0

    p2, g2, rows, row_align = _flatten_2d(pred, gt)
    vmem_cap, num_cores = _tpu_params()
    if force_cores is not None:
        num_cores = int(force_cores)

    native_bytes = p2.size * p2.dtype.itemsize + g2.size * g2.dtype.itemsize
    auto_resident = native_bytes <= (vmem_cap - RESIDENT_RESERVE)
    use_resident = (force_path == "resident") or (force_path is None and auto_resident)

    if use_resident:
        l1_sum, l2_sum, n1, nm = _berhu_resident(p2, g2, rows, row_align,
                                                 vmem_cap, tile_m)
    else:
        l1_sum, l2_sum, n1, nm = _berhu_streaming(p2, g2, rows, row_align,
                                                  vmem_cap, num_cores, tile_m)

    n2 = nm - n1
    # Guard empty regions (e.g. all gt<=0, or pred==gt everywhere): contribute 0.
    l1 = jnp.where(n1 > 0, l1_sum / jnp.maximum(n1, 1.0), 0.0)
    l2 = jnp.where(n2 > 0, l2_sum / jnp.maximum(n2, 1.0), 0.0)
    return 0.5 * (l1 + l2)


# Pure-JAX reference (same guarded-division semantics) for verification.
def berhu_ref(pred, gt):
    pred = pred.astype(jnp.float32)
    gt = gt.astype(jnp.float32)
    mask = gt > 0
    diff = pred - gt
    absd = jnp.abs(diff)
    c = 0.2 * jnp.max(absd)
    idx1 = (absd <= c) & mask
    idx2 = (absd > c) & mask
    n1 = jnp.sum(idx1.astype(jnp.float32))
    n2 = jnp.sum(idx2.astype(jnp.float32))
    l1 = jnp.where(n1 > 0, jnp.sum(jnp.where(idx1, absd, 0.0)) / jnp.maximum(n1, 1.0), 0.0)
    l2 = jnp.where(n2 > 0, jnp.sum(jnp.where(idx2, diff * diff, 0.0)) / jnp.maximum(n2, 1.0), 0.0)
    return 0.5 * (l1 + l2)


if __name__ == "__main__":
    key = jax.random.PRNGKey(0)

    cases = []
    # 1) Typical NCHW depth-prediction shapes, f32 (multi-tile via small tile_m).
    key, k1, k2 = jax.random.split(key, 3)
    pred = jax.random.normal(k1, (2, 4, 16, 16), jnp.float32)
    gt = jnp.maximum(jax.random.normal(k2, (2, 4, 16, 16), jnp.float32), 0.0)
    cases.append(("nchw_f32", pred, gt, 8, None))

    # 2) Ragged last tile (rows=24, tile_m=16) in both paths.
    key, k1, k2 = jax.random.split(key, 3)
    pred = jax.random.normal(k1, (1, 1, 24, 128), jnp.float32)
    gt = jnp.maximum(jax.random.normal(k2, (1, 1, 24, 128), jnp.float32), 0.0)
    cases.append(("ragged_tiles", pred, gt, 16, None))
    # 2b) Duplicate-tile masking: 3 tiles split across a forced 2-core grid.
    cases.append(("dup_tiles_2core", pred, gt, 8, 2))

    # 3) numel not a multiple of the layout chunk (pad path) + bf16 native dtype.
    key, k1, k2 = jax.random.split(key, 3)
    pred = jax.random.normal(k1, (1, 3, 5, 64), jnp.float32).astype(jnp.bfloat16)
    gt = jnp.maximum(jax.random.normal(k2, (1, 3, 5, 64), jnp.float32), 0.0).astype(jnp.bfloat16)
    cases.append(("pad_bf16", pred, gt, 8, None))

    for name, p_in, g_in, tm, fc in cases:
        ref = jax.block_until_ready(berhu_ref(p_in, g_in))
        for path in ("resident", "streaming"):
            out = jax.block_until_ready(
                berhu_loss(p_in, g_in, force_path=path, tile_m=tm, force_cores=fc))
            if not bool(jnp.allclose(out, ref, rtol=1e-4, atol=1e-5)):
                raise AssertionError(f"{name}/{path}: pallas={out} ref={ref}")

    # Auto path selection (defaults).
    out = jax.block_until_ready(berhu_loss(cases[0][1], cases[0][2]))
    ref = berhu_ref(cases[0][1], cases[0][2])
    if not bool(jnp.allclose(out, ref, rtol=1e-4, atol=1e-5)):
        raise AssertionError(f"auto: pallas={out} ref={ref}")

    print("KERNEL_OK")
</pallas_src>

<mosaic_0001>
module attributes {stable_mosaic.version = 11 : i64} {
  func.func @kernel(%arg0: i32, %arg1: memref<8x128xf32, #tpu.memory_space<vmem>>, %arg2: memref<8x128xf32, #tpu.memory_space<vmem>>, %arg3: memref<8x128xf32, #tpu.memory_space<vmem>>, %arg4: memref<8x128xf32, #tpu.memory_space<vmem>>, %arg5: memref<8x128xf32, #tpu.memory_space<vmem>>, %arg6: memref<8x128xf32, #tpu.memory_space<vmem>>, %arg7: memref<2x8x128xf32, #tpu.memory_space<vmem>>, %arg8: memref<2x8x128xf32, #tpu.memory_space<vmem>>, %arg9: memref<8x128xf32, #tpu.memory_space<vmem>>) attributes {dimension_semantics = [#tpu.dimension_semantics<arbitrary>], iteration_bounds = array<i64: 2>, scalar_prefetch = 0 : i64, scratch_operands = 3 : i64, tpu.core_type = #tpu.core_type<tc>, window_params = [{transform_indices = @transform_0, window_bounds = array<i64: 8, 128>}, {transform_indices = @transform_1, window_bounds = array<i64: 8, 128>}, {pipeline_mode = #tpu.pipeline_mode<synchronous>, transform_indices = @transform_2, window_bounds = array<i64: 8, 128>}, {pipeline_mode = #tpu.pipeline_mode<synchronous>, transform_indices = @transform_3, window_bounds = array<i64: 8, 128>}, {pipeline_mode = #tpu.pipeline_mode<synchronous>, transform_indices = @transform_4, window_bounds = array<i64: 8, 128>}, {pipeline_mode = #tpu.pipeline_mode<synchronous>, transform_indices = @transform_5, window_bounds = array<i64: 8, 128>}]} {
    %c0_i32 = arith.constant 0 : i32
    %0 = arith.cmpi eq, %arg0, %c0_i32 : i32
    %1 = arith.extui %0 : i1 to i32
    %c0_i32_0 = arith.constant 0 : i32
    %2 = arith.cmpi ne, %1, %c0_i32_0 : i32
    scf.if %2 {
      %cst_13 = arith.constant 0.000000e+00 : f32
      %23 = vector.broadcast %cst_13 : f32 to vector<8x128xf32>
      %c0_14 = arith.constant 0 : index
      %c0_15 = arith.constant 0 : index
      %24 = vector.load %arg9[%c0_14, %c0_15] : memref<8x128xf32, #tpu.memory_space<vmem>>, vector<8x128xf32>
      tpu.vector_store %arg9[%c0_14, %c0_15], %23 {strides = array<i32>} : memref<8x128xf32, #tpu.memory_space<vmem>>, vector<8x128xf32>,
      %cst_16 = arith.constant 0.000000e+00 : f32
      %25 = vector.broadcast %cst_16 : f32 to vector<8x128xf32>
      %c0_17 = arith.constant 0 : index
      %c0_18 = arith.constant 0 : index
      %26 = vector.load %arg3[%c0_17, %c0_18] : memref<8x128xf32, #tpu.memory_space<vmem>>, vector<8x128xf32>
      tpu.vector_store %arg3[%c0_17, %c0_18], %25 {strides = array<i32>} : memref<8x128xf32, #tpu.memory_space<vmem>>, vector<8x128xf32>,
      %cst_19 = arith.constant 0.000000e+00 : f32
      %27 = vector.broadcast %cst_19 : f32 to vector<8x128xf32>
      %c0_20 = arith.constant 0 : index
      %c0_21 = arith.constant 0 : index
      %28 = vector.load %arg4[%c0_20, %c0_21] : memref<8x128xf32, #tpu.memory_space<vmem>>, vector<8x128xf32>
      tpu.vector_store %arg4[%c0_20, %c0_21], %27 {strides = array<i32>} : memref<8x128xf32, #tpu.memory_space<vmem>>, vector<8x128xf32>,
      %cst_22 = arith.constant 0.000000e+00 : f32
      %29 = vector.broadcast %cst_22 : f32 to vector<8x128xf32>
      %c0_23 = arith.constant 0 : index
      %c0_24 = arith.constant 0 : index
      %30 = vector.load %arg5[%c0_23, %c0_24] : memref<8x128xf32, #tpu.memory_space<vmem>>, vector<8x128xf32>
      tpu.vector_store %arg5[%c0_23, %c0_24], %29 {strides = array<i32>} : memref<8x128xf32, #tpu.memory_space<vmem>>, vector<8x128xf32>,
      %cst_25 = arith.constant 0.000000e+00 : f32
      %31 = vector.broadcast %cst_25 : f32 to vector<8x128xf32>
      %c0_26 = arith.constant 0 : index
      %c0_27 = arith.constant 0 : index
      %32 = vector.load %arg6[%c0_26, %c0_27] : memref<8x128xf32, #tpu.memory_space<vmem>>, vector<8x128xf32>
      tpu.vector_store %arg6[%c0_26, %c0_27], %31 {strides = array<i32>} : memref<8x128xf32, #tpu.memory_space<vmem>>, vector<8x128xf32>,
    } else {
    }
    %c0 = arith.constant 0 : index
    %c0_1 = arith.constant 0 : index
    %3 = vector.load %arg1[%c0, %c0_1] : memref<8x128xf32, #tpu.memory_space<vmem>>, vector<8x128xf32>
    %c0_2 = arith.constant 0 : index
    %c0_3 = arith.constant 0 : index
    %4 = vector.load %arg2[%c0_2, %c0_3] : memref<8x128xf32, #tpu.memory_space<vmem>>, vector<8x128xf32>
    %5 = arith.index_cast %arg0 : i32 to index
    %c0_4 = arith.constant 0 : index
    %c0_5 = arith.constant 0 : index
    %6 = vector.load %arg7[%5, %c0_4, %c0_5] : memref<2x8x128xf32, #tpu.memory_space<vmem>>, vector<1x8x128xf32>
    %7 = vector.shape_cast %6 : vector<1x8x128xf32> to vector<8x128xf32>
    %8 = vector.shape_cast %3 : vector<8x128xf32> to vector<1x8x128xf32>
    tpu.vector_store %arg7[%5, %c0_4, %c0_5], %8 {strides = array<i32>} : memref<2x8x128xf32, #tpu.memory_space<vmem>>, vector<1x8x128xf32>,
    %9 = arith.index_cast %arg0 : i32 to index
    %c0_6 = arith.constant 0 : index
    %c0_7 = arith.constant 0 : index
    %10 = vector.load %arg8[%9, %c0_6, %c0_7] : memref<2x8x128xf32, #tpu.memory_space<vmem>>, vector<1x8x128xf32>
    %11 = vector.shape_cast %10 : vector<1x8x128xf32> to vector<8x128xf32>
    %12 = vector.shape_cast %4 : vector<8x128xf32> to vector<1x8x128xf32>
    tpu.vector_store %arg8[%9, %c0_6, %c0_7], %12 {strides = array<i32>} : memref<2x8x128xf32, #tpu.memory_space<vmem>>, vector<1x8x128xf32>,
    %13 = arith.subf %3, %4 : vector<8x128xf32>
    %14 = math.absf %13 : vector<8x128xf32>
    %c0_8 = arith.constant 0 : index
    %c0_9 = arith.constant 0 : index
    %15 = vector.load %arg9[%c0_8, %c0_9] : memref<8x128xf32, #tpu.memory_space<vmem>>, vector<8x128xf32>
    %16 = vector.shape_cast %14 : vector<8x128xf32> to vector<1x8x128xf32>
    %cst = arith.constant dense<0xFF800000> : vector<8x128xf32>
    %17 = vector.multi_reduction <maximumf>, %16, %cst [0] : vector<1x8x128xf32> to vector<8x128xf32>
    %18 = arith.maximumf %15, %17 : vector<8x128xf32>
    %c0_10 = arith.constant 0 : index
    %c0_11 = arith.constant 0 : index
    %19 = vector.load %arg9[%c0_10, %c0_11] : memref<8x128xf32, #tpu.memory_space<vmem>>, vector<8x128xf32>
    tpu.vector_store %arg9[%c0_10, %c0_11], %18 {strides = array<i32>} : memref<8x128xf32, #tpu.memory_space<vmem>>, vector<8x128xf32>,
    %c1_i32 = arith.constant 1 : i32
    %20 = arith.cmpi eq, %arg0, %c1_i32 : i32
    %21 = arith.extui %20 : i1 to i32
    %c0_i32_12 = arith.constant 0 : i32
    %22 = arith.cmpi ne, %21, %c0_i32_12 : i32
    scf.if %22 {
      %c0_13 = arith.constant 0 : index
      %c0_14 = arith.constant 0 : index
      %23 = vector.load %arg9[%c0_13, %c0_14] : memref<8x128xf32, #tpu.memory_space<vmem>>, vector<8x128xf32>
      %24 = vector.shape_cast %23 : vector<8x128xf32> to vector<1x8x128xf32>
      %cst_15 = arith.constant dense<0xFF800000> : vector<1xf32>
      %25 = vector.multi_reduction <maximumf>, %24, %cst_15 [1, 2] : vector<1x8x128xf32> to vector<1xf32>
      %26 = vector.shape_cast %25 : vector<1xf32> to vector<1x1x1xf32>
      %27 = vector.extract %26[0, 0, 0] : f32 from vector<1x1x1xf32>
      %cst_16 = arith.constant 2.000000e-01 : f32
      %28 = arith.mulf %cst_16, %27 : f32
      %cst_17 = arith.constant 0.000000e+00 : f32
      %29 = vector.broadcast %cst_17 : f32 to vector<8x128xf32>
      %c0_i32_18 = arith.constant 0 : i32
      %c2_i32 = arith.constant 2 : i32
      %30 = arith.addi %c0_i32_18, %c2_i32 : i32
      %c1_i32_19 = arith.constant 1 : i32
      %31:4 = scf.for %arg10 = %c0_i32_18 to %30 step %c1_i32_19 iter_args(%arg11 = %29, %arg12 = %29, %arg13 = %29, %arg14 = %29) -> (vector<8x128xf32>, vector<8x128xf32>, vector<8x128xf32>, vector<8x128xf32>)  : i32 {
        %36 = arith.index_cast %arg10 : i32 to index
        %c0_29 = arith.constant 0 : index
        %c0_30 = arith.constant 0 : index
        %37 = vector.load %arg7[%36, %c0_29, %c0_30] : memref<2x8x128xf32, #tpu.memory_space<vmem>>, vector<1x8x128xf32>
        %38 = vector.shape_cast %37 : vector<1x8x128xf32> to vector<8x128xf32>
        %39 = arith.index_cast %arg10 : i32 to index
        %c0_31 = arith.constant 0 : index
        %c0_32 = arith.constant 0 : index
        %40 = vector.load %arg8[%39, %c0_31, %c0_32] : memref<2x8x128xf32, #tpu.memory_space<vmem>>, vector<1x8x128xf32>
        %41 = vector.shape_cast %40 : vector<1x8x128xf32> to vector<8x128xf32>
        %42 = arith.subf %38, %41 : vector<8x128xf32>
        %43 = math.absf %42 : vector<8x128xf32>
        %cst_33 = arith.constant 0.000000e+00 : f32
        %44 = vector.broadcast %cst_33 : f32 to vector<8x128xf32>
        %45 = arith.cmpf ogt, %41, %44 : vector<8x128xf32>
        %46 = vector.broadcast %28 : f32 to vector<8x128xf32>
        %47 = arith.cmpf ole, %43, %46 : vector<8x128xf32>
        %48 = arith.andi %47, %45 : vector<8x128xi1>
        %49 = vector.broadcast %28 : f32 to vector<8x128xf32>
        %50 = arith.cmpf ogt, %43, %49 : vector<8x128xf32>
        %51 = arith.andi %50, %45 : vector<8x128xi1>
        %cst_34 = arith.constant 0.000000e+00 : f32
        %52 = vector.broadcast %cst_34 : f32 to vector<8x128xf32>
        %53 = arith.select %48, %43, %52 : vector<8x128xi1>, vector<8x128xf32>
        %54 = vector.shape_cast %53 : vector<8x128xf32> to vector<1x8x128xf32>
        %cst_35 = arith.constant dense<0.000000e+00> : vector<8x128xf32>
        %55 = vector.multi_reduction <add>, %54, %cst_35 [0] : vector<1x8x128xf32> to vector<8x128xf32>
        %56 = arith.addf %arg11, %55 : vector<8x128xf32>
        %57 = arith.mulf %42, %42 : vector<8x128xf32>
        %cst_36 = arith.constant 0.000000e+00 : f32
        %58 = vector.broadcast %cst_36 : f32 to vector<8x128xf32>
        %59 = arith.select %51, %57, %58 : vector<8x128xi1>, vector<8x128xf32>
        %60 = vector.shape_cast %59 : vector<8x128xf32> to vector<1x8x128xf32>
        %cst_37 = arith.constant dense<0.000000e+00> : vector<8x128xf32>
        %61 = vector.multi_reduction <add>, %60, %cst_37 [0] : vector<1x8x128xf32> to vector<8x128xf32>
        %62 = arith.addf %arg12, %61 : vector<8x128xf32>
        %63 = arith.extui %48 : vector<8x128xi1> to vector<8x128xi32>
        %64 = arith.sitofp %63 : vector<8x128xi32> to vector<8x128xf32>
        %65 = vector.shape_cast %64 : vector<8x128xf32> to vector<1x8x128xf32>
        %cst_38 = arith.constant dense<0.000000e+00> : vector<8x128xf32>
        %66 = vector.multi_reduction <add>, %65, %cst_38 [0] : vector<1x8x128xf32> to vector<8x128xf32>
        %67 = arith.addf %arg13, %66 : vector<8x128xf32>
        %68 = arith.extui %45 : vector<8x128xi1> to vector<8x128xi32>
        %69 = arith.sitofp %68 : vector<8x128xi32> to vector<8x128xf32>
        %70 = vector.shape_cast %69 : vector<8x128xf32> to vector<1x8x128xf32>
        %cst_39 = arith.constant dense<0.000000e+00> : vector<8x128xf32>
        %71 = vector.multi_reduction <add>, %70, %cst_39 [0] : vector<1x8x128xf32> to vector<8x128xf32>
        %72 = arith.addf %arg14, %71 : vector<8x128xf32>
        scf.yield %56, %62, %67, %72 : vector<8x128xf32>, vector<8x128xf32>, vector<8x128xf32>, vector<8x128xf32>
      }
      %c2_i32_20 = arith.constant 2 : i32
      %c0_21 = arith.constant 0 : index
      %c0_22 = arith.constant 0 : index
      %32 = vector.load %arg3[%c0_21, %c0_22] : memref<8x128xf32, #tpu.memory_space<vmem>>, vector<8x128xf32>
      tpu.vector_store %arg3[%c0_21, %c0_22], %31#0 {strides = array<i32>} : memref<8x128xf32, #tpu.memory_space<vmem>>, vector<8x128xf32>,
      %c0_23 = arith.constant 0 : index
      %c0_24 = arith.constant 0 : index
      %33 = vector.load %arg4[%c0_23, %c0_24] : memref<8x128xf32, #tpu.memory_space<vmem>>, vector<8x128xf32>
      tpu.vector_store %arg4[%c0_23, %c0_24], %31#1 {strides = array<i32>} : memref<8x128xf32, #tpu.memory_space<vmem>>, vector<8x128xf32>,
      %c0_25 = arith.constant 0 : index
      %c0_26 = arith.constant 0 : index
      %34 = vector.load %arg5[%c0_25, %c0_26] : memref<8x128xf32, #tpu.memory_space<vmem>>, vector<8x128xf32>
      tpu.vector_store %arg5[%c0_25, %c0_26], %31#2 {strides = array<i32>} : memref<8x128xf32, #tpu.memory_space<vmem>>, vector<8x128xf32>,
      %c0_27 = arith.constant 0 : index
      %c0_28 = arith.constant 0 : index
      %35 = vector.load %arg6[%c0_27, %c0_28] : memref<8x128xf32, #tpu.memory_space<vmem>>, vector<8x128xf32>
      tpu.vector_store %arg6[%c0_27, %c0_28], %31#3 {strides = array<i32>} : memref<8x128xf32, #tpu.memory_space<vmem>>, vector<8x128xf32>,
    } else {
    }
    return
  }
  func.func @transform_0(%arg0: i32) -> (i32, i32) {
    %c0_i32 = arith.constant 0 : i32
    %c0_i32_0 = arith.constant 0 : i32
    return %arg0, %c0_i32 : i32, i32
  }
  func.func @transform_1(%arg0: i32) -> (i32, i32) {
    %c0_i32 = arith.constant 0 : i32
    %c0_i32_0 = arith.constant 0 : i32
    return %arg0, %c0_i32 : i32, i32
  }
  func.func @transform_2(%arg0: i32) -> (i32, i32) {
    %c0_i32 = arith.constant 0 : i32
    %c0_i32_0 = arith.constant 0 : i32
    %c0_i32_1 = arith.constant 0 : i32
    return %c0_i32, %c0_i32_0 : i32, i32
  }
  func.func @transform_3(%arg0: i32) -> (i32, i32) {
    %c0_i32 = arith.constant 0 : i32
    %c0_i32_0 = arith.constant 0 : i32
    %c0_i32_1 = arith.constant 0 : i32
    return %c0_i32, %c0_i32_0 : i32, i32
  }
  func.func @transform_4(%arg0: i32) -> (i32, i32) {
    %c0_i32 = arith.constant 0 : i32
    %c0_i32_0 = arith.constant 0 : i32
    %c0_i32_1 = arith.constant 0 : i32
    return %c0_i32, %c0_i32_0 : i32, i32
  }
  func.func @transform_5(%arg0: i32) -> (i32, i32) {
    %c0_i32 = arith.constant 0 : i32
    %c0_i32_0 = arith.constant 0 : i32
    %c0_i32_1 = arith.constant 0 : i32
    return %c0_i32, %c0_i32_0 : i32, i32
  }
}

</mosaic_0001>

<llo_original>
// kernel: tpu_custom_call.1
$region0: #{tpu_custom_call.1}
  #allocation0 [shape = 'u32[]', space=smem, size = 0x4, offset = 0x4, fixed_abs, tag = 'smem constant byte address 0x4 - core index']
  #allocation1 [shape = 'u32[72,128]{1,0:T(1,128)}', space=vmem, size = 0x9000, scoped, tag = 'internal scratch']
  #allocation2 [shape = 'f32[2,8,128]{2,1,0:T(8,128)}', space=vmem, size = 0x2000, scoped, tag = 'scratch operand']
  #allocation3 [shape = 'f32[2,8,128]{2,1,0:T(8,128)}', space=vmem, size = 0x2000, scoped, tag = 'scratch operand']
  #allocation4 [shape = 'f32[8,128]{1,0:T(8,128)}', space=vmem, size = 0x1000, scoped, tag = 'scratch operand']
  %s0 = inlined_call_operand.hbm [shape: f32[16,128], index: 0, kind: input, shape index: {}]
  %s1 = inlined_call_operand.hbm [shape: f32[16,128], index: 1, kind: input, shape index: {}]
  %s2 = inlined_call_operand.hbm [shape: f32[8,128], index: 2, kind: output, shape index: {0}]
  %s3 = inlined_call_operand.hbm [shape: f32[8,128], index: 3, kind: output, shape index: {1}]
  %s4 = inlined_call_operand.hbm [shape: f32[8,128], index: 4, kind: output, shape index: {2}]
  %s5 = inlined_call_operand.hbm [shape: f32[8,128], index: 5, kind: output, shape index: {3}]
  %6 = xla_tuple %s2, %s3, %s4, %s5
  %s7 = sld [smem:[#allocation0]]
  $region88: #{tpu_custom_call.1} parent=0
    _
  %s9 = ssub.s32 1, %s7
  %s10 = scalar_select 0, %s9, %s7
  $region1: #{tpu_custom_call.1} parent=0
    #allocation5 [shape = 'u8[8192]{0}', space=vmem, size = 0x2000, scoped, tag = 'input window, operand 0']
    #allocation6 [shape = 's32[2]{0}', space=sflag, size = 0x8, scoped, tag = 'scoped memory for tpu_custom_call.1']
    #allocation7 [shape = 's32[2]{0}', space=sflag, size = 0x8, scoped, tag = 'scoped memory for tpu_custom_call.1']
    #allocation8 [shape = 'u8[8192]{0}', space=vmem, size = 0x2000, scoped, tag = 'input window, operand 1']
    #allocation9 [shape = 's32[2]{0}', space=sflag, size = 0x8, scoped, tag = 'scoped memory for tpu_custom_call.1']
    #allocation10 [shape = 'u8[4096]{0}', space=vmem, size = 0x1000, scoped, tag = 'output window, operand 0, single buffered']
    #allocation11 [shape = 'u8[4096]{0}', space=vmem, size = 0x1000, scoped, tag = 'output window, operand 1, single buffered']
    #allocation12 [shape = 's32[1]{0}', space=sflag, size = 0x4, scoped, tag = 'scoped memory for tpu_custom_call.1']
    #allocation13 [shape = 'u8[4096]{0}', space=vmem, size = 0x1000, scoped, tag = 'output window, operand 2, single buffered']
    #allocation14 [shape = 'u8[4096]{0}', space=vmem, size = 0x1000, scoped, tag = 'output window, operand 3, single buffered']
    #allocation15 [shape = 's32[1]{0}', space=sflag, size = 0x4, scoped, tag = 'scoped memory for tpu_custom_call.1']
    %11 = vsyncpa [#allocation6], 0
    %s12 = scalar_lea.sflag [#allocation6], 1
    %13 = vsyncpa %s12, 0
    %14 = vsyncpa [#allocation9], 0
    %s15 = scalar_lea.sflag [#allocation9], 1
    %16 = vsyncpa %s15, 0
    %17 = vsyncpa [#allocation7], 0
    %18 = vsyncpa [#allocation12], 0
    %19 = vsyncpa [#allocation15], 0
    loop: start=0, step=1, limit=4
    $region2: #{tpu_custom_call.1} parent=1 // loop_pre_header
      _
    $region3: #{tpu_custom_call.1} parent=1 // loop_header
      %s21 = sphi 0, %s25
      %p22 = scmp.ge.s32.totalorder %s21, 4
      %s31 = sphi 0, %s33
      %s34 = sphi 0, %s31
      %s35 = sphi 0, %s34
      %s51 = sphi 0, %s35
      %s57 = sphi 0, %s59
      %s60 = sphi 0, %s57
      %s61 = sphi 0, %s60
      %s77 = sphi 0, %s61
      %s81 = sphi 0, %s81
      %s83 = sphi 0, %s81
      %s84 = sphi 0, %s83
      %s98 = sphi 0, %s84
      %s102 = sphi 0, %s102
      %s104 = sphi 0, %s102
      %s105 = sphi 0, %s104
      %s119 = sphi 0, %s105
      %s123 = sphi 0, %s123
      %s125 = sphi 0, %s123
      %s126 = sphi 0, %s125
      %s140 = sphi 0, %s126
      %s144 = sphi 0, %s144
      %s146 = sphi 0, %s144
      %s147 = sphi 0, %s146
      %s161 = sphi 0, %s147
    $region4: #{tpu_custom_call.1} parent=1 // loop_header_branch
      %24 = sbr.rel (%p22) target = $region8
    $region5: #{tpu_custom_call.1} parent=1 // loop_body
      %s26 = ssub.s32 %s21, 1
      %s27 = ssub.s32 %s21, 2
      %s28 = sadd.s32 %s21, 1
      %s29 = ssub.s32 %s21, %s28
      %p30 = scmp.eq.s32.totalorder %s29, 0
      %s32 = sadd.s32 %s31, 1
      %s33 = scalar_select %p30, %s31, %s32
      %p36 = pneg %p30
      %p37 = scmp.eq.s32.totalorder %s21, 1
      %p38 = por %p36, %p37
      %p39 = scmp.ne.s32.totalorder %s31, %s34
      %p40 = scmp.eq.s32.totalorder %s21, 0
      %p41 = por %p39, %p40
      %p42 = scmp.ne.s32.totalorder %s31, %s34
      %p43 = scmp.eq.s32.totalorder %s26, 1
      %p44 = por %p42, %p43
      %p45 = scmp.ne.s32.totalorder %s34, %s35
      %p46 = scmp.eq.s32.totalorder %s26, 0
      %p47 = por %p45, %p46
      %p48 = scmp.ne.s32.totalorder %s34, %s35
      %p49 = scmp.eq.s32.totalorder %s27, 1
      %p50 = por %p48, %p49
      %p52 = scmp.ne.s32.totalorder %s35, %s51
      %p53 = scmp.eq.s32.totalorder %s27, 0
      %p54 = por %p52, %p53
      %s55 = ssub.s32 %s21, %s28
      %p56 = scmp.eq.s32.totalorder %s55, 0
      %s58 = sadd.s32 %s57, 1
      %s59 = scalar_select %p56, %s57, %s58
      %p62 = pneg %p56
      %p63 = scmp.eq.s32.totalorder %s21, 1
      %p64 = por %p62, %p63
      %p65 = scmp.ne.s32.totalorder %s57, %s60
      %p66 = scmp.eq.s32.totalorder %s21, 0
      %p67 = por %p65, %p66
      %p68 = scmp.ne.s32.totalorder %s57, %s60
      %p69 = scmp.eq.s32.totalorder %s26, 1
      %p70 = por %p68, %p69
      %p71 = scmp.ne.s32.totalorder %s60, %s61
      %p72 = scmp.eq.s32.totalorder %s26, 0
      %p73 = por %p71, %p72
      %p74 = scmp.ne.s32.totalorder %s60, %s61
      %p75 = scmp.eq.s32.totalorder %s27, 1
      %p76 = por %p74, %p75
      %p78 = scmp.ne.s32.totalorder %s61, %s77
      %p79 = scmp.eq.s32.totalorder %s27, 0
      %p80 = por %p78, %p79
      %s82 = sadd.s32 %s81, 1
      %p85 = scmp.eq.s32.totalorder %s21, 1
      %p86 = scmp.ne.s32.totalorder %s81, %s83
      %p87 = scmp.eq.s32.totalorder %s21, 0
      %p88 = por %p86, %p87
      %p89 = scmp.ne.s32.totalorder %s81, %s83
      %p90 = scmp.eq.s32.totalorder %s26, 1
      %p91 = por %p89, %p90
      %p92 = scmp.ne.s32.totalorder %s83, %s84
      %p93 = scmp.eq.s32.totalorder %s26, 0
      %p94 = por %p92, %p93
      %p95 = scmp.ne.s32.totalorder %s83, %s84
      %p96 = scmp.eq.s32.totalorder %s27, 1
      %p97 = por %p95, %p96
      %p99 = scmp.ne.s32.totalorder %s84, %s98
      %p100 = scmp.eq.s32.totalorder %s27, 0
      %p101 = por %p99, %p100
      %s103 = sadd.s32 %s102, 1
      %p106 = scmp.eq.s32.totalorder %s21, 1
      %p107 = scmp.ne.s32.totalorder %s102, %s104
      %p108 = scmp.eq.s32.totalorder %s21, 0
      %p109 = por %p107, %p108
      %p110 = scmp.ne.s32.totalorder %s102, %s104
      %p111 = scmp.eq.s32.totalorder %s26, 1
      %p112 = por %p110, %p111
      %p113 = scmp.ne.s32.totalorder %s104, %s105
      %p114 = scmp.eq.s32.totalorder %s26, 0
      %p115 = por %p113, %p114
      %p116 = scmp.ne.s32.totalorder %s104, %s105
      %p117 = scmp.eq.s32.totalorder %s27, 1
      %p118 = por %p116, %p117
      %p120 = scmp.ne.s32.totalorder %s105, %s119
      %p121 = scmp.eq.s32.totalorder %s27, 0
      %p122 = por %p120, %p121
      %s124 = sadd.s32 %s123, 1
      %p127 = scmp.eq.s32.totalorder %s21, 1
      %p128 = scmp.ne.s32.totalorder %s123, %s125
      %p129 = scmp.eq.s32.totalorder %s21, 0
      %p130 = por %p128, %p129
      %p131 = scmp.ne.s32.totalorder %s123, %s125
      %p132 = scmp.eq.s32.totalorder %s26, 1
      %p133 = por %p131, %p132
      %p134 = scmp.ne.s32.totalorder %s125, %s126
      %p135 = scmp.eq.s32.totalorder %s26, 0
      %p136 = por %p134, %p135
      %p137 = scmp.ne.s32.totalorder %s125, %s126
      %p138 = scmp.eq.s32.totalorder %s27, 1
      %p139 = por %p137, %p138
      %p141 = scmp.ne.s32.totalorder %s126, %s140
      %p142 = scmp.eq.s32.totalorder %s27, 0
      %p143 = por %p141, %p142
      %s145 = sadd.s32 %s144, 1
      %p148 = scmp.eq.s32.totalorder %s21, 1
      %p149 = scmp.ne.s32.totalorder %s144, %s146
      %p150 = scmp.eq.s32.totalorder %s21, 0
      %p151 = por %p149, %p150
      %p152 = scmp.ne.s32.totalorder %s144, %s146
      %p153 = scmp.eq.s32.totalorder %s26, 1
      %p154 = por %p152, %p153
      %p155 = scmp.ne.s32.totalorder %s146, %s147
      %p156 = scmp.eq.s32.totalorder %s26, 0
      %p157 = por %p155, %p156
      %p158 = scmp.ne.s32.totalorder %s146, %s147
      %p159 = scmp.eq.s32.totalorder %s27, 1
      %p160 = por %p158, %p159
      %p162 = scmp.ne.s32.totalorder %s147, %s161
      %p163 = scmp.eq.s32.totalorder %s27, 0
      %p164 = por %p162, %p163
      %p165 = scmp.le.s32.totalorder 1, %s21
      %p166 = scmp.lt.s32.totalorder %s21, 3
      %p167 = pnand %p165, %p166
      %p168 = pneg %p167
      // Predicated region
      $region9: #{tpu_custom_call.1} parent=5 // pred_check
        _
      $region10: #{tpu_custom_call.1} parent=5 // pred_check_branch
        %170 = sbr.rel (%p167) target = $region12
      $region11: #{tpu_custom_call.1} parent=5 // pred_region
        %s171 = ssub.s32 %s21, 1
      $region12: #{tpu_custom_call.1} parent=5 // pred_fallthru
        _
      %p172 = scmp.lt.s32.totalorder %s21, 2
      // Predicated region
      $region13: #{tpu_custom_call.1} parent=5 // pred_check
        %p173 = pneg %p172
      $region14: #{tpu_custom_call.1} parent=5 // pred_check_branch
        %175 = sbr.rel (%p173) target = $region16
      $region15: #{tpu_custom_call.1} parent=5 // pred_region
        // Predicated region
        $region17: #{tpu_custom_call.1} parent=15 // pred_check
          %p176 = pneg %p41
        $region18: #{tpu_custom_call.1} parent=15 // pred_check_branch
          %178 = sbr.rel (%p176) target = $region20
        $region19: #{tpu_custom_call.1} parent=15 // pred_region
          %s179 = sand.u32 %s31, 1
          %s180 = scalar_lea.sflag [#allocation6], %s179
          %s181 = sand.u32 %s31, 1
          %s182 = smul.addr %s181, 8
          %s183 = scalar_lea.vmem [#allocation5], %s182
          %185 = vsyncadd %s180, 0
          %s186 = smul.addr %s21, 8
          %s187 = scalar_lea.hbm %s0, %s186
          %s189 = sshll.u32 %s187, 4
          %s190 = int_to_ptr.hbm [resolvable:$true] %s189
          %s191 = sshll.u32 %s183, 4
          %s192 = int_to_ptr.vmem [resolvable:$true] %s191
          %194 = dma.hbm_to_vmem [thread:$0]  %s190, 128, %s192, %s180
        $region20: #{tpu_custom_call.1} parent=15 // pred_fallthru
          _
        // Predicated region
        $region21: #{tpu_custom_call.1} parent=15 // pred_check
          %p195 = pneg %p67
        $region22: #{tpu_custom_call.1} parent=15 // pred_check_branch
          %197 = sbr.rel (%p195) target = $region24
        $region23: #{tpu_custom_call.1} parent=15 // pred_region
          %s198 = sand.u32 %s57, 1
          %s199 = scalar_lea.sflag [#allocation9], %s198
          %s200 = sand.u32 %s57, 1
          %s201 = smul.addr %s200, 8
          %s202 = scalar_lea.vmem [#allocation8], %s201
          %204 = vsyncadd %s199, 0
          %s205 = smul.addr %s21, 8
          %s206 = scalar_lea.hbm %s1, %s205
          %s208 = sshll.u32 %s206, 4
          %s209 = int_to_ptr.hbm [resolvable:$true] %s208
          %s210 = sshll.u32 %s202, 4
          %s211 = int_to_ptr.vmem [resolvable:$true] %s210
          %213 = dma.hbm_to_vmem [thread:$0]  %s209, 128, %s211, %s199
        $region24: #{tpu_custom_call.1} parent=15 // pred_fallthru
          _
      $region16: #{tpu_custom_call.1} parent=5 // pred_fallthru
        _
      %p214 = scmp.le.s32.totalorder 1, %s21
      %p215 = scmp.lt.s32.totalorder %s21, 3
      %p216 = pnand %p214, %p215
      %p217 = pneg %p216
      // Predicated region
      $region25: #{tpu_custom_call.1} parent=5 // pred_check
        _
      $region26: #{tpu_custom_call.1} parent=5 // pred_check_branch
        %219 = sbr.rel (%p216) target = $region28
      $region27: #{tpu_custom_call.1} parent=5 // pred_region
        %s220 = ssub.s32 %s21, 1
        %s221 = sand.u32 %s34, 1
        %s222 = scalar_lea.sflag [#allocation6], %s221
        %s223 = sand.u32 %s34, 1
        %s224 = smul.addr %s223, 8
        %s225 = scalar_lea.vmem [#allocation5], %s224
        // Predicated region
        $region29: #{tpu_custom_call.1} parent=27 // pred_check
          %p226 = pneg %p47
        $region30: #{tpu_custom_call.1} parent=27 // pred_check_branch
          %228 = sbr.rel (%p226) target = $region32
        $region31: #{tpu_custom_call.1} parent=27 // pred_region
          %230 = dma.done %s222, 128
        $region32: #{tpu_custom_call.1} parent=27 // pred_fallthru
          _
        %s231 = sand.u32 %s60, 1
        %s232 = scalar_lea.sflag [#allocation9], %s231
        %s233 = sand.u32 %s60, 1
        %s234 = smul.addr %s233, 8
        %s235 = scalar_lea.vmem [#allocation8], %s234
        // Predicated region
        $region33: #{tpu_custom_call.1} parent=27 // pred_check
          %p236 = pneg %p73
        $region34: #{tpu_custom_call.1} parent=27 // pred_check_branch
          %238 = sbr.rel (%p236) target = $region36
        $region35: #{tpu_custom_call.1} parent=27 // pred_region
          %240 = dma.done %s232, 128
        $region36: #{tpu_custom_call.1} parent=27 // pred_fallthru
          _
        %s241 = sand.u32 %s34, 1
        %s242 = scalar_lea.sflag [#allocation6], %s241
        %s243 = sand.u32 %s34, 1
        %s244 = smul.addr %s243, 8
        %s245 = scalar_lea.vmem [#allocation5], %s244
        %p246 = pneg %p47
        %p247 = pneg %p44
        %s248 = sand.u32 %s60, 1
        %s249 = scalar_lea.sflag [#allocation9], %s248
        %s250 = sand.u32 %s60, 1
        %s251 = smul.addr %s250, 8
        %s252 = scalar_lea.vmem [#allocation8], %s251
        %p253 = pneg %p73
        %p254 = pneg %p70
        %p255 = pneg %p94
        %p256 = pneg %p91
        %p257 = pneg %p115
        %p258 = pneg %p112
        %p259 = pneg %p136
        %p260 = pneg %p133
        %p261 = pneg %p157
        %p262 = pneg %p154
        %p263 = scmp.eq.s32.totalorder %s26, 0
        // Predicated region
        $region37: #{tpu_custom_call.1} parent=27 // pred_check
          %p264 = pneg %p263
        $region38: #{tpu_custom_call.1} parent=27 // pred_check_branch
          %266 = sbr.rel (%p264) target = $region40
        $region39: #{tpu_custom_call.1} parent=27 // pred_region
          %267 = vst [vmem:[#allocation4] sm:$0xff] 0.0
          %268 = vst [vmem:[#allocation10] sm:$0xff] 0.0
          %269 = vst [vmem:[#allocation11] sm:$0xff] 0.0
          %270 = vst [vmem:[#allocation13] sm:$0xff] 0.0
          %271 = vst [vmem:[#allocation14] sm:$0xff] 0.0
        $region40: #{tpu_custom_call.1} parent=27 // pred_fallthru
          _
        %v272 = vld [vmem:[%s225] sm:$0xff]
        %v273 = vld [vmem:[%s235] sm:$0xff]
        %s274 = smul.u32 %s26, 8
        %s275 = scalar_lea.vmem [#allocation2], %s274
        %276 = vst [vmem:[%s275] sm:$0xff] %v272
        %s277 = scalar_lea.vmem [#allocation3], %s274
        %278 = vst [vmem:[%s277] sm:$0xff] %v273
        %v279 = vsub.f32 %v272, %v273
        %v280 = vand.u32 2147483647, %v279
        %v281 = vld [vmem:[#allocation4] sm:$0xff]
        %v282 = vmax.f32 %v281, %v280
        %283 = vst [vmem:[#allocation4] sm:$0xff] %v282
        %p284 = scmp.eq.s32.totalorder %s26, 1
        // Predicated region
        $region41: #{tpu_custom_call.1} parent=27 // pred_check
          %p285 = pneg %p284
        $region42: #{tpu_custom_call.1} parent=27 // pred_check_branch
          %287 = sbr.rel (%p285) target = $region44
        $region43: #{tpu_custom_call.1} parent=27 // pred_region
          %v288 = vld [vmem:[#allocation4] sm:$0xff]
          %289 = vmax.xlane.f32.xlu0 %v288
          %v290 = vpop.xlane.xlu0 %289
          %v291 = vrot.slane %v290, 4
          %v292 = vmax.f32 %v290, %v291
          %v293 = vrot.slane %v292, 2
          %v294 = vmax.f32 %v292, %v293
          %v295 = vrot.slane %v294, 1
          %v296 = vmax.f32 %v294, %v295
          %s297 = vtos %v296
          %s298 = smul.f32 %s297, 0.2
          loop: start=0, step=1, limit=2
          $region45: #{tpu_custom_call.1} parent=43 // loop_pre_header
            _
          $region46: #{tpu_custom_call.1} parent=43 // loop_header
            %s300 = sphi 0, %s304
            %p301 = scmp.ge.s32.totalorder %s300, 2
            %v305 = vphi 0.0, %v324
            %v306 = vphi 0.0, %v328
            %v307 = vphi 0.0, %v332
            %v308 = vphi 0.0, %v336
          $region47: #{tpu_custom_call.1} parent=43 // loop_header_branch
            %303 = sbr.rel (%p301) target = $region51
          $region48: #{tpu_custom_call.1} parent=43 // loop_body
            %s309 = smul.u32 %s300, 8
            %s310 = scalar_lea.vmem [#allocation2], %s309
            %v311 = vld [vmem:[%s310] sm:$0xff]
            %s312 = scalar_lea.vmem [#allocation3], %s309
            %v313 = vld [vmem:[%s312] sm:$0xff]
            %v314 = vsub.f32 %v311, %v313
            %v315 = vand.u32 2147483647, %v314
            %vm316 = vcmp.gt.f32.partialorder %v313, 0.0
            %v317 = vstv %s298
            %vm318 = vcmp.le.f32.partialorder %v315, %v317
            %vm319 = vmand %vm318, %vm316
            %vm320 = vcmp.gt.f32.partialorder %v315, %v317
            %vm321 = vmand %vm320, %vm316
            %v322 = vsel %vm319, %v315, 0.0
            %v323 = vadd.f32 %v322, 0.0
            %v324 = vadd.f32 %v305, %v323
            %v325 = vmul.f32 %v314, %v314
            %v326 = vsel %vm321, %v325, 0.0
            %v327 = vadd.f32 %v326, 0.0
            %v328 = vadd.f32 %v306, %v327
            %v329 = vsel %vm319, 1, 0
            %v330 = vcvt.s32.f32 %v329
            %v331 = vadd.f32 %v330, 0.0
            %v332 = vadd.f32 %v307, %v331
            %v333 = vsel %vm316, 1, 0
            %v334 = vcvt.s32.f32 %v333
            %v335 = vadd.f32 %v334, 0.0
            %v336 = vadd.f32 %v308, %v335
          $region49: #{tpu_custom_call.1} parent=43 // loop_footer
            %s304 = sadd.s32 1, %s300
          $region50: #{tpu_custom_call.1} parent=43 // loop_footer_branch
            %299 = sbr.rel target = $region46
          $region51: #{tpu_custom_call.1} parent=43 // loop_exit
            _
          %337 = vst [vmem:[#allocation10] sm:$0xff] %v305
          %338 = vst [vmem:[#allocation11] sm:$0xff] %v306
          %339 = vst [vmem:[#allocation13] sm:$0xff] %v307
          %340 = vst [vmem:[#allocation14] sm:$0xff] %v308
        $region44: #{tpu_custom_call.1} parent=27 // pred_fallthru
          _
        // Predicated region
        $region52: #{tpu_custom_call.1} parent=27 // pred_check
          %p341 = pneg %p91
        $region53: #{tpu_custom_call.1} parent=27 // pred_check_branch
          %343 = sbr.rel (%p341) target = $region55
        $region54: #{tpu_custom_call.1} parent=27 // pred_region
          %345 = vsyncadd [#allocation7], 0
          %s347 = sshll.u32 [#allocation10], 4
          %s348 = int_to_ptr.vmem [resolvable:$true] %s347
          %s349 = sshll.u32 %s2, 4
          %s350 = int_to_ptr.hbm [resolvable:$true] %s349
          %352 = dma.vmem_to_hbm [thread:$0]  %s348, 128, %s350, [#allocation7]
        $region55: #{tpu_custom_call.1} parent=27 // pred_fallthru
          _
        // Predicated region
        $region56: #{tpu_custom_call.1} parent=27 // pred_check
          %p353 = pneg %p112
        $region57: #{tpu_custom_call.1} parent=27 // pred_check_branch
          %355 = sbr.rel (%p353) target = $region59
        $region58: #{tpu_custom_call.1} parent=27 // pred_region
          %357 = vsyncadd [#allocation12], 0
          %s359 = sshll.u32 [#allocation11], 4
          %s360 = int_to_ptr.vmem [resolvable:$true] %s359
          %s361 = sshll.u32 %s3, 4
          %s362 = int_to_ptr.hbm [resolvable:$true] %s361
          %364 = dma.vmem_to_hbm [thread:$0]  %s360, 128, %s362, [#allocation12]
        $region59: #{tpu_custom_call.1} parent=27 // pred_fallthru
          _
        // Predicated region
        $region60: #{tpu_custom_call.1} parent=27 // pred_check
          %p365 = pneg %p133
        $region61: #{tpu_custom_call.1} parent=27 // pred_check_branch
          %367 = sbr.rel (%p365) target = $region63
        $region62: #{tpu_custom_call.1} parent=27 // pred_region
          %369 = vsyncadd [#allocation12], 0
          %s371 = sshll.u32 [#allocation13], 4
          %s372 = int_to_ptr.vmem [resolvable:$true] %s371
          %s373 = sshll.u32 %s4, 4
          %s374 = int_to_ptr.hbm [resolvable:$true] %s373
          %376 = dma.vmem_to_hbm [thread:$0]  %s372, 128, %s374, [#allocation12]
        $region63: #{tpu_custom_call.1} parent=27 // pred_fallthru
          _
        // Predicated region
        $region64: #{tpu_custom_call.1} parent=27 // pred_check
          %p377 = pneg %p154
        $region65: #{tpu_custom_call.1} parent=27 // pred_check_branch
          %379 = sbr.rel (%p377) target = $region67
        $region66: #{tpu_custom_call.1} parent=27 // pred_region
          %381 = vsyncadd [#allocation15], 0
          %s383 = sshll.u32 [#allocation14], 4
          %s384 = int_to_ptr.vmem [resolvable:$true] %s383
          %s385 = sshll.u32 %s5, 4
          %s386 = int_to_ptr.hbm [resolvable:$true] %s385
          %388 = dma.vmem_to_hbm [thread:$0]  %s384, 128, %s386, [#allocation15]
        $region67: #{tpu_custom_call.1} parent=27 // pred_fallthru
          _
        // Predicated region
        $region68: #{tpu_custom_call.1} parent=27 // pred_check
          %p389 = pneg %p91
        $region69: #{tpu_custom_call.1} parent=27 // pred_check_branch
          %391 = sbr.rel (%p389) target = $region71
        $region70: #{tpu_custom_call.1} parent=27 // pred_region
          %393 = dma.done [#allocation7], 128
        $region71: #{tpu_custom_call.1} parent=27 // pred_fallthru
          _
        // Predicated region
        $region72: #{tpu_custom_call.1} parent=27 // pred_check
          %p394 = pneg %p112
        $region73: #{tpu_custom_call.1} parent=27 // pred_check_branch
          %396 = sbr.rel (%p394) target = $region75
        $region74: #{tpu_custom_call.1} parent=27 // pred_region
          %398 = dma.done [#allocation12], 128
        $region75: #{tpu_custom_call.1} parent=27 // pred_fallthru
          _
        // Predicated region
        $region76: #{tpu_custom_call.1} parent=27 // pred_check
          %p399 = pneg %p133
        $region77: #{tpu_custom_call.1} parent=27 // pred_check_branch
          %401 = sbr.rel (%p399) target = $region79
        $region78: #{tpu_custom_call.1} parent=27 // pred_region
          %403 = dma.done [#allocation12], 128
        $region79: #{tpu_custom_call.1} parent=27 // pred_fallthru
          _
        // Predicated region
        $region80: #{tpu_custom_call.1} parent=27 // pred_check
          %p404 = pneg %p154
        $region81: #{tpu_custom_call.1} parent=27 // pred_check_branch
          %406 = sbr.rel (%p404) target = $region83
        $region82: #{tpu_custom_call.1} parent=27 // pred_region
          %408 = dma.done [#allocation15], 128
        $region83: #{tpu_custom_call.1} parent=27 // pred_fallthru
          _
      $region28: #{tpu_custom_call.1} parent=5 // pred_fallthru
        _
      %p409 = scmp.le.s32.totalorder 2, %s21
      // Predicated region
      $region84: #{tpu_custom_call.1} parent=5 // pred_check
        %p410 = pneg %p409
      $region85: #{tpu_custom_call.1} parent=5 // pred_check_branch
        %412 = sbr.rel (%p410) target = $region87
      $region86: #{tpu_custom_call.1} parent=5 // pred_region
        %s413 = ssub.s32 %s21, 2
      $region87: #{tpu_custom_call.1} parent=5 // pred_fallthru
        _
    $region6: #{tpu_custom_call.1} parent=1 // loop_footer
      %s25 = sadd.s32 1, %s21
    $region7: #{tpu_custom_call.1} parent=1 // loop_footer_branch
      %20 = sbr.rel target = $region3
    $region8: #{tpu_custom_call.1} parent=1 // loop_exit
      _
    %414 = vsyncpa [#allocation6], 1
    %s415 = scalar_lea.sflag [#allocation6], 1
    %416 = vsyncpa %s415, 1
    %417 = vsyncpa [#allocation9], 1
    %s418 = scalar_lea.sflag [#allocation9], 1
    %419 = vsyncpa %s418, 1
    %420 = vsyncpa [#allocation7], 1
    %s421 = scalar_lea.sflag [#allocation7], 1
    %422 = vsyncpa %s421, 1
    %423 = vsyncpa [#allocation12], 1
    %424 = vsyncpa [#allocation15], 1

</llo_original>
